<compile_context>
chip_gen: v5e
topology: v5e:2x2
jax: 0.10.0
libtpu: 0.0.40
codegen_flags: <defaults>
</compile_context>

<pallas_src>
import functools

import jax
import jax.numpy as jnp
from jax.experimental import pallas as pl
from jax.experimental.pallas import tpu as pltpu

_LANES = 128
_SUBLANES = 8
_SMALL_INPUT_BYTES = 2 << 20    # below this, plain XLA beats a pallas_call


# ---------------------------------------------------------------------------
# Shared per-element math.
# ---------------------------------------------------------------------------
def _products(p, t, w0, w1, uniform_w):
    """Weighted p*t / p*p / t*t.  For uniform weights the constant w**2 factor
    is applied in the wrapper instead (saves VPU work in the hot loop)."""
    if uniform_w:
        return p * t, p * p, t * t
    w = t * (w1 - w0) + w0
    wp = w * p
    wt = w * t
    return wp * wt, wp * wp, wt * wt


def _dice_sums_jax(p, t, w0, w1):
    p = p.astype(jnp.float32)
    t = t.astype(jnp.float32)
    w = t * (w1 - w0) + w0
    pw = w * p
    tw = w * t
    return (jnp.sum(pw * tw, axis=-1),
            jnp.sum(pw * pw, axis=-1),
            jnp.sum(tw * tw, axis=-1))


def _dice_finish(inter, pp, tt, smooth, scale=1.0):
    if scale != 1.0:
        inter = scale * inter
        pp = scale * pp
        tt = scale * tt
    union = pp + tt
    dice = 1.0 - (2.0 * inter + smooth) / (union + smooth)
    return jnp.mean(dice)


# ---------------------------------------------------------------------------
# Kernel A: lane-aligned inputs, viewed (zero-copy) as (B, R, 128).
# ---------------------------------------------------------------------------
def _dice_rows_kernel(p_ref, t_ref, inter_ref, pp_ref, tt_ref, *,
                      w0, w1, uniform_w, total_rows, tile_rows, steps,
                      nblocks, exact):
    k = pl.program_id(1)

    @pl.when(k == 0)
    def _():
        inter_ref[...] = jnp.zeros_like(inter_ref)
        pp_ref[...] = jnp.zeros_like(pp_ref)
        tt_ref[...] = jnp.zeros_like(tt_ref)

    # Stream in native dtype; cast on the VPU (free slots in a mem-bound loop).
    p = p_ref[...].astype(jnp.float32)       # (B, tile_rows, 128)
    t = t_ref[...].astype(jnp.float32)
    b = p.shape[0]

    def accumulate(pv, tv):
        pt, pp_, tt_ = _products(pv, tv, w0, w1, uniform_w)
        # (B, T, 128) -> (B, T//8, 8, 128) is a pure re-tiling; the axis-1 sum
        # is whole-vreg VPU adds into the resident (B, 8, 128) accumulators —
        # no per-step XLU sublane reduce, no partial-sublane accumulator RMW.
        inter_ref[...] += pt.reshape(b, -1, _SUBLANES, _LANES).sum(axis=1)[None]
        pp_ref[...] += pp_.reshape(b, -1, _SUBLANES, _LANES).sum(axis=1)[None]
        tt_ref[...] += tt_.reshape(b, -1, _SUBLANES, _LANES).sum(axis=1)[None]

    if exact:
        # Tiling divides exactly and there are no duplicate split steps:
        # no masks, no branches, pure streaming.
        accumulate(p, t)
    else:
        blk = pl.program_id(0) * steps + k
        row0 = blk * tile_rows
        is_real = blk < nblocks                     # skip clamped duplicates
        is_full = row0 + tile_rows <= total_rows    # interior block?

        @pl.when(jnp.logical_and(is_real, is_full))
        def _():                                    # mask-free hot path
            accumulate(p, t)

        @pl.when(jnp.logical_and(is_real, jnp.logical_not(is_full)))
        def _():                                    # boundary block only
            rows = jax.lax.broadcasted_iota(jnp.int32, p.shape, 1) + row0
            valid = rows < total_rows
            zero = jnp.zeros((), jnp.float32)
            accumulate(jnp.where(valid, p, zero), jnp.where(valid, t, zero))


# ---------------------------------------------------------------------------
# Kernel B: ragged inputs (N % 128 != 0), processed directly as (B, N) with a
# lane mask on the boundary block.  Zero-copy: no jnp.pad, no slice.
# ---------------------------------------------------------------------------
def _dice_cols_kernel(p_ref, t_ref, inter_ref, pp_ref, tt_ref, *,
                      w0, w1, uniform_w, total_cols, tile_cols, steps,
                      nblocks):
    k = pl.program_id(1)

    @pl.when(k == 0)
    def _():
        inter_ref[...] = jnp.zeros_like(inter_ref)
        pp_ref[...] = jnp.zeros_like(pp_ref)
        tt_ref[...] = jnp.zeros_like(tt_ref)

    p = p_ref[...].astype(jnp.float32)       # (B, tile_cols)
    t = t_ref[...].astype(jnp.float32)

    def accumulate(pv, tv):
        pt, pp_, tt_ = _products(pv, tv, w0, w1, uniform_w)
        # Lane-reduce to (B, 1) and broadcast-accumulate into the resident
        # (1, B, 128) block (all lanes carry the same running sum; the wrapper
        # reads lane 0).
        inter_ref[...] += jnp.sum(pt, axis=-1, keepdims=True)[None]
        pp_ref[...] += jnp.sum(pp_, axis=-1, keepdims=True)[None]
        tt_ref[...] += jnp.sum(tt_, axis=-1, keepdims=True)[None]

    blk = pl.program_id(0) * steps + k
    col0 = blk * tile_cols
    is_real = blk < nblocks
    is_full = col0 + tile_cols <= total_cols

    @pl.when(jnp.logical_and(is_real, is_full))
    def _():
        accumulate(p, t)

    @pl.when(jnp.logical_and(is_real, jnp.logical_not(is_full)))
    def _():
        cols = jax.lax.broadcasted_iota(jnp.int32, p.shape, 1) + col0
        valid = cols < total_cols
        zero = jnp.zeros((), jnp.float32)
        accumulate(jnp.where(valid, p, zero), jnp.where(valid, t, zero))


# ---------------------------------------------------------------------------
# Hardware-derived defaults.
# ---------------------------------------------------------------------------
def _chip_defaults():
    """(tile_bytes, num_splits, vmem_cap) derived from the local TPU."""
    vmem_cap = None
    try:
        vmem_cap = int(pltpu.get_tpu_info().vmem_capacity_bytes)
    except Exception:           # interpret mode / API drift: stay conservative
        vmem_cap = None
    small_vmem = vmem_cap is not None and vmem_cap <= (64 << 20)   # v7x-like
    tile_bytes = (4 << 20) if (small_vmem or vmem_cap is None) else (8 << 20)
    num_splits = 2 if small_vmem else 1    # 2 TensorCores only on v7x-class
    return tile_bytes, num_splits, (vmem_cap or (64 << 20))


# ---------------------------------------------------------------------------
# Wrapper.
# ---------------------------------------------------------------------------
def weighted_dice_loss(logit, truth, weights=(0.5, 0.5), smooth=1e-05, *,
                       use_pallas=None, tile_bytes=None, num_splits=None):
    """Pallas implementation of WeightedDiceLoss.forward."""
    w0, w1 = float(weights[0]), float(weights[1])
    smooth = float(smooth)
    uniform_w = (w0 == w1)

    batch = logit.shape[0]
    p = logit.reshape(batch, -1)             # metadata-only for contiguous input
    t = truth.reshape(batch, -1)
    assert p.shape == t.shape
    n = p.shape[1]

    itemsize = max(jnp.dtype(p.dtype).itemsize, jnp.dtype(t.dtype).itemsize)
    total_bytes = 2 * batch * n * itemsize

    aligned = (n % _LANES == 0)
    rows = n // _LANES
    feasible = (aligned and rows >= _SUBLANES) or ((not aligned) and n >= _LANES)

    if use_pallas is None:
        use_pallas = feasible and total_bytes >= _SMALL_INPUT_BYTES
    if not (use_pallas and feasible):
        # Tiny / oddly shaped inputs: plain XLA beats a pallas_call launch.
        return _dice_finish(*_dice_sums_jax(p, t, w0, w1), smooth)

    auto_tile, auto_splits, vmem_cap = _chip_defaults()
    tile_bytes = int(tile_bytes) if tile_bytes is not None else auto_tile
    num_splits = max(1, int(num_splits) if num_splits is not None else auto_splits)

    def compiler(block_bytes):
        # 2 inputs x 2 pipeline buffers x block, plus headroom; capped well
        # below the physical VMEM of the detected chip.
        limit = min(vmem_cap // 2, max(16 << 20, 4 * block_bytes + (8 << 20)))
        return pltpu.CompilerParams(
            dimension_semantics=("parallel", "arbitrary"),
            vmem_limit_bytes=int(limit))

    flops_per_pair = 6 if uniform_w else 12

    if aligned:
        # ---- rows kernel: (B, R, 128), full vreg occupancy ----
        p3 = p.reshape(batch, rows, _LANES)
        t3 = t.reshape(batch, rows, _LANES)

        tile_rows = tile_bytes // (batch * _LANES * itemsize)
        tile_rows = max(_SUBLANES, (tile_rows // _SUBLANES) * _SUBLANES)
        tile_rows = min(tile_rows, (rows // _SUBLANES) * _SUBLANES)
        nblocks = pl.cdiv(rows, tile_rows)
        num_splits = min(num_splits, nblocks)
        steps = pl.cdiv(nblocks, num_splits)
        exact = (num_splits * steps == nblocks) and (nblocks * tile_rows == rows)
        block_bytes = batch * tile_rows * _LANES * itemsize

        def in_map(par, k):
            return (0, jnp.minimum(par * steps + k, nblocks - 1), 0)

        def out_map(par, k):
            return (par, 0, 0, 0)

        kernel = functools.partial(
            _dice_rows_kernel, w0=w0, w1=w1, uniform_w=uniform_w,
            total_rows=rows, tile_rows=tile_rows, steps=steps,
            nblocks=nblocks, exact=exact)

        part = jax.ShapeDtypeStruct((num_splits, batch, _SUBLANES, _LANES),
                                    jnp.float32)
        out_block = pl.BlockSpec((1, batch, _SUBLANES, _LANES), out_map)
        cost = pl.CostEstimate(
            flops=flops_per_pair * batch * n, transcendentals=0,
            bytes_accessed=(p3.size * p3.dtype.itemsize
                            + t3.size * t3.dtype.itemsize
                            + 3 * num_splits * batch * _SUBLANES * _LANES * 4))

        inter, pp, tt = pl.pallas_call(
            kernel,
            out_shape=(part, part, part),
            grid_spec=pltpu.PrefetchScalarGridSpec(
                num_scalar_prefetch=0,
                grid=(num_splits, steps),
                in_specs=[pl.BlockSpec((batch, tile_rows, _LANES), in_map),
                          pl.BlockSpec((batch, tile_rows, _LANES), in_map)],
                out_specs=(out_block, out_block, out_block)),
            compiler_params=compiler(block_bytes),
            cost_estimate=cost,
        )(p3, t3)

        inter_s = jnp.sum(inter, axis=(0, 2, 3))
        pp_s = jnp.sum(pp, axis=(0, 2, 3))
        tt_s = jnp.sum(tt, axis=(0, 2, 3))
    else:
        # ---- cols kernel: raw (B, N), lane-masked boundary block ----
        tile_cols = tile_bytes // (batch * itemsize)
        tile_cols = max(_LANES, (tile_cols // _LANES) * _LANES)
        tile_cols = min(tile_cols, (n // _LANES) * _LANES)
        nblocks = pl.cdiv(n, tile_cols)
        num_splits = min(num_splits, nblocks)
        steps = pl.cdiv(nblocks, num_splits)
        block_bytes = batch * tile_cols * itemsize

        def in_map(par, k):
            return (0, jnp.minimum(par * steps + k, nblocks - 1))

        def out_map(par, k):
            return (par, 0, 0)

        kernel = functools.partial(
            _dice_cols_kernel, w0=w0, w1=w1, uniform_w=uniform_w,
            total_cols=n, tile_cols=tile_cols, steps=steps, nblocks=nblocks)

        part = jax.ShapeDtypeStruct((num_splits, batch, _LANES), jnp.float32)
        out_block = pl.BlockSpec((1, batch, _LANES), out_map)
        cost = pl.CostEstimate(
            flops=flops_per_pair * batch * n, transcendentals=0,
            bytes_accessed=(p.size * p.dtype.itemsize
                            + t.size * t.dtype.itemsize
                            + 3 * num_splits * batch * _LANES * 4))

        inter, pp, tt = pl.pallas_call(
            kernel,
            out_shape=(part, part, part),
            grid_spec=pltpu.PrefetchScalarGridSpec(
                num_scalar_prefetch=0,
                grid=(num_splits, steps),
                in_specs=[pl.BlockSpec((batch, tile_cols), in_map),
                          pl.BlockSpec((batch, tile_cols), in_map)],
                out_specs=(out_block, out_block, out_block)),
            compiler_params=compiler(block_bytes),
            cost_estimate=cost,
        )(p, t)

        # Every lane of each accumulator holds the same running sum.
        inter_s = jnp.sum(inter[:, :, 0], axis=0)
        pp_s = jnp.sum(pp[:, :, 0], axis=0)
        tt_s = jnp.sum(tt[:, :, 0], axis=0)

    return _dice_finish(inter_s, pp_s, tt_s, smooth,
                        scale=(w0 * w0) if uniform_w else 1.0)


def weighted_dice_loss_ref(logit, truth, weights=(0.5, 0.5), smooth=1e-05):
    """Pure-JAX reference matching the PyTorch module."""
    b = logit.shape[0]
    p = logit.reshape(b, -1)
    t = truth.reshape(b, -1)
    return _dice_finish(*_dice_sums_jax(p, t, float(weights[0]),
                                        float(weights[1])), float(smooth))


if __name__ == "__main__":
    key = jax.random.PRNGKey(0)
    k1, k2, k3, k4, k5, k6 = jax.random.split(key, 6)

    # Test 1: aligned N (4*16*16 = 1024 -> 8 rows of 128), default uniform
    # weights; forced through the Pallas rows kernel (exact tiling, no masks).
    logit1 = jax.nn.sigmoid(jax.random.normal(k1, (2, 4, 16, 16), jnp.float32))
    truth1 = (jax.random.uniform(k2, (2, 4, 16, 16)) > 0.5).astype(jnp.float32)
    out1 = jax.block_until_ready(weighted_dice_loss(logit1, truth1,
                                                    use_pallas=True))
    ref1 = weighted_dice_loss_ref(logit1, truth1)
    assert jnp.allclose(out1, ref1, atol=1e-5, rtol=1e-5), (out1, ref1)

    # Test 2: ragged N (4*20*20 = 1600, not a multiple of 128) -> zero-copy
    # lane-masked cols kernel (no wrapper jnp.pad); non-uniform weights; small
    # tile + 2-way split to exercise clamped duplicate steps and the boundary
    # lane mask.
    logit2 = jax.nn.sigmoid(jax.random.normal(k3, (2, 4, 20, 20), jnp.float32))
    truth2 = (jax.random.uniform(k4, (2, 4, 20, 20)) > 0.5).astype(jnp.float32)
    out2 = jax.block_until_ready(weighted_dice_loss(
        logit2, truth2, weights=(0.3, 0.7), use_pallas=True,
        tile_bytes=2048, num_splits=2))
    ref2 = weighted_dice_loss_ref(logit2, truth2, weights=(0.3, 0.7))
    assert jnp.allclose(out2, ref2, atol=1e-5, rtol=1e-5), (out2, ref2)

    # Test 3: aligned but non-dividing tiling (36 rows, tile_rows = 16) with a
    # 2-way split: exercises interior vs. boundary pl.when branches and the
    # skip of clamped duplicate steps; non-uniform weights.
    logit3 = jax.nn.sigmoid(jax.random.normal(k5, (2, 4, 32, 36), jnp.float32))
    truth3 = (jax.random.uniform(k6, (2, 4, 32, 36)) > 0.5).astype(jnp.float32)
    out3 = jax.block_until_ready(weighted_dice_loss(
        logit3, truth3, weights=(0.3, 0.7), use_pallas=True,
        tile_bytes=2 * 16 * 128 * 4, num_splits=2))
    ref3 = weighted_dice_loss_ref(logit3, truth3, weights=(0.3, 0.7))
    assert jnp.allclose(out3, ref3, atol=1e-5, rtol=1e-5), (out3, ref3)

    # Test 4: small-input auto path -> pure-JAX fallback (no Pallas launch).
    out4 = jax.block_until_ready(weighted_dice_loss(logit1, truth1))
    assert jnp.allclose(out4, ref1, atol=1e-6, rtol=1e-6), (out4, ref1)

    print("KERNEL_OK")
</pallas_src>

<mosaic_0001>
module attributes {stable_mosaic.version = 11 : i64} {
  func.func @_dice_rows_kernel(%arg0: i32, %arg1: i32, %arg2: memref<2x8x128xf32, #tpu.memory_space<vmem>>, %arg3: memref<2x8x128xf32, #tpu.memory_space<vmem>>, %arg4: memref<1x2x8x128xf32, #tpu.memory_space<vmem>>, %arg5: memref<1x2x8x128xf32, #tpu.memory_space<vmem>>, %arg6: memref<1x2x8x128xf32, #tpu.memory_space<vmem>>) attributes {dimension_semantics = [#tpu.dimension_semantics<parallel>, #tpu.dimension_semantics<arbitrary>], iteration_bounds = array<i64: 1, 1>, scalar_prefetch = 0 : i64, scratch_operands = 0 : i64, tpu.core_type = #tpu.core_type<tc>, window_params = [{transform_indices = @transform_0, window_bounds = array<i64: 2, 8, 128>}, {transform_indices = @transform_1, window_bounds = array<i64: 2, 8, 128>}, {transform_indices = @transform_2, window_bounds = array<i64: 1, 2, 8, 128>}, {transform_indices = @transform_3, window_bounds = array<i64: 1, 2, 8, 128>}, {transform_indices = @transform_4, window_bounds = array<i64: 1, 2, 8, 128>}]} {
    %c0_i32 = arith.constant 0 : i32
    %0 = arith.cmpi eq, %arg1, %c0_i32 : i32
    %1 = arith.extui %0 : i1 to i32
    %c0_i32_0 = arith.constant 0 : i32
    %2 = arith.cmpi ne, %1, %c0_i32_0 : i32
    scf.if %2 {
      %cst_32 = arith.constant 0.000000e+00 : f32
      %26 = vector.broadcast %cst_32 : f32 to vector<1x2x8x128xf32>
      %c0_33 = arith.constant 0 : index
      %c0_34 = arith.constant 0 : index
      %c0_35 = arith.constant 0 : index
      %c0_36 = arith.constant 0 : index
      %27 = vector.load %arg4[%c0_33, %c0_34, %c0_35, %c0_36] : memref<1x2x8x128xf32, #tpu.memory_space<vmem>>, vector<1x2x8x128xf32>
      tpu.vector_store %arg4[%c0_33, %c0_34, %c0_35, %c0_36], %26 {strides = array<i32>} : memref<1x2x8x128xf32, #tpu.memory_space<vmem>>, vector<1x2x8x128xf32>,
      %cst_37 = arith.constant 0.000000e+00 : f32
      %28 = vector.broadcast %cst_37 : f32 to vector<1x2x8x128xf32>
      %c0_38 = arith.constant 0 : index
      %c0_39 = arith.constant 0 : index
      %c0_40 = arith.constant 0 : index
      %c0_41 = arith.constant 0 : index
      %29 = vector.load %arg5[%c0_38, %c0_39, %c0_40, %c0_41] : memref<1x2x8x128xf32, #tpu.memory_space<vmem>>, vector<1x2x8x128xf32>
      tpu.vector_store %arg5[%c0_38, %c0_39, %c0_40, %c0_41], %28 {strides = array<i32>} : memref<1x2x8x128xf32, #tpu.memory_space<vmem>>, vector<1x2x8x128xf32>,
      %cst_42 = arith.constant 0.000000e+00 : f32
      %30 = vector.broadcast %cst_42 : f32 to vector<1x2x8x128xf32>
      %c0_43 = arith.constant 0 : index
      %c0_44 = arith.constant 0 : index
      %c0_45 = arith.constant 0 : index
      %c0_46 = arith.constant 0 : index
      %31 = vector.load %arg6[%c0_43, %c0_44, %c0_45, %c0_46] : memref<1x2x8x128xf32, #tpu.memory_space<vmem>>, vector<1x2x8x128xf32>
      tpu.vector_store %arg6[%c0_43, %c0_44, %c0_45, %c0_46], %30 {strides = array<i32>} : memref<1x2x8x128xf32, #tpu.memory_space<vmem>>, vector<1x2x8x128xf32>,
    } else {
    }
    %c0 = arith.constant 0 : index
    %c0_1 = arith.constant 0 : index
    %c0_2 = arith.constant 0 : index
    %3 = vector.load %arg2[%c0, %c0_1, %c0_2] : memref<2x8x128xf32, #tpu.memory_space<vmem>>, vector<2x8x128xf32>
    %c0_3 = arith.constant 0 : index
    %c0_4 = arith.constant 0 : index
    %c0_5 = arith.constant 0 : index
    %4 = vector.load %arg3[%c0_3, %c0_4, %c0_5] : memref<2x8x128xf32, #tpu.memory_space<vmem>>, vector<2x8x128xf32>
    %5 = arith.mulf %3, %4 : vector<2x8x128xf32>
    %6 = arith.mulf %3, %3 : vector<2x8x128xf32>
    %7 = arith.mulf %4, %4 : vector<2x8x128xf32>
    %c0_6 = arith.constant 0 : index
    %c0_7 = arith.constant 0 : index
    %c0_8 = arith.constant 0 : index
    %c0_9 = arith.constant 0 : index
    %8 = vector.load %arg4[%c0_6, %c0_7, %c0_8, %c0_9] : memref<1x2x8x128xf32, #tpu.memory_space<vmem>>, vector<1x2x8x128xf32>
    %9 = vector.shape_cast %5 : vector<2x8x128xf32> to vector<2x1x8x128xf32>
    %cst = arith.constant dense<0.000000e+00> : vector<2x8x128xf32>
    %10 = vector.multi_reduction <add>, %9, %cst [1] : vector<2x1x8x128xf32> to vector<2x8x128xf32>
    %11 = vector.shape_cast %10 : vector<2x8x128xf32> to vector<1x2x8x128xf32>
    %12 = arith.addf %8, %11 : vector<1x2x8x128xf32>
    %c0_10 = arith.constant 0 : index
    %c0_11 = arith.constant 0 : index
    %c0_12 = arith.constant 0 : index
    %c0_13 = arith.constant 0 : index
    %13 = vector.load %arg4[%c0_10, %c0_11, %c0_12, %c0_13] : memref<1x2x8x128xf32, #tpu.memory_space<vmem>>, vector<1x2x8x128xf32>
    tpu.vector_store %arg4[%c0_10, %c0_11, %c0_12, %c0_13], %12 {strides = array<i32>} : memref<1x2x8x128xf32, #tpu.memory_space<vmem>>, vector<1x2x8x128xf32>,
    %c0_14 = arith.constant 0 : index
    %c0_15 = arith.constant 0 : index
    %c0_16 = arith.constant 0 : index
    %c0_17 = arith.constant 0 : index
    %14 = vector.load %arg5[%c0_14, %c0_15, %c0_16, %c0_17] : memref<1x2x8x128xf32, #tpu.memory_space<vmem>>, vector<1x2x8x128xf32>
    %15 = vector.shape_cast %6 : vector<2x8x128xf32> to vector<2x1x8x128xf32>
    %cst_18 = arith.constant dense<0.000000e+00> : vector<2x8x128xf32>
    %16 = vector.multi_reduction <add>, %15, %cst_18 [1] : vector<2x1x8x128xf32> to vector<2x8x128xf32>
    %17 = vector.shape_cast %16 : vector<2x8x128xf32> to vector<1x2x8x128xf32>
    %18 = arith.addf %14, %17 : vector<1x2x8x128xf32>
    %c0_19 = arith.constant 0 : index
    %c0_20 = arith.constant 0 : index
    %c0_21 = arith.constant 0 : index
    %c0_22 = arith.constant 0 : index
    %19 = vector.load %arg5[%c0_19, %c0_20, %c0_21, %c0_22] : memref<1x2x8x128xf32, #tpu.memory_space<vmem>>, vector<1x2x8x128xf32>
    tpu.vector_store %arg5[%c0_19, %c0_20, %c0_21, %c0_22], %18 {strides = array<i32>} : memref<1x2x8x128xf32, #tpu.memory_space<vmem>>, vector<1x2x8x128xf32>,
    %c0_23 = arith.constant 0 : index
    %c0_24 = arith.constant 0 : index
    %c0_25 = arith.constant 0 : index
    %c0_26 = arith.constant 0 : index
    %20 = vector.load %arg6[%c0_23, %c0_24, %c0_25, %c0_26] : memref<1x2x8x128xf32, #tpu.memory_space<vmem>>, vector<1x2x8x128xf32>
    %21 = vector.shape_cast %7 : vector<2x8x128xf32> to vector<2x1x8x128xf32>
    %cst_27 = arith.constant dense<0.000000e+00> : vector<2x8x128xf32>
    %22 = vector.multi_reduction <add>, %21, %cst_27 [1] : vector<2x1x8x128xf32> to vector<2x8x128xf32>
    %23 = vector.shape_cast %22 : vector<2x8x128xf32> to vector<1x2x8x128xf32>
    %24 = arith.addf %20, %23 : vector<1x2x8x128xf32>
    %c0_28 = arith.constant 0 : index
    %c0_29 = arith.constant 0 : index
    %c0_30 = arith.constant 0 : index
    %c0_31 = arith.constant 0 : index
    %25 = vector.load %arg6[%c0_28, %c0_29, %c0_30, %c0_31] : memref<1x2x8x128xf32, #tpu.memory_space<vmem>>, vector<1x2x8x128xf32>
    tpu.vector_store %arg6[%c0_28, %c0_29, %c0_30, %c0_31], %24 {strides = array<i32>} : memref<1x2x8x128xf32, #tpu.memory_space<vmem>>, vector<1x2x8x128xf32>,
    return
  }
  func.func @transform_0(%arg0: i32, %arg1: i32) -> (i32, i32, i32) {
    %c1_i32 = arith.constant 1 : i32
    %0 = arith.muli %arg0, %c1_i32 : i32
    %1 = arith.addi %0, %arg1 : i32
    %c0_i32 = arith.constant 0 : i32
    %2 = arith.minsi %1, %c0_i32 : i32
    %c0_i32_0 = arith.constant 0 : i32
    %c0_i32_1 = arith.constant 0 : i32
    %c0_i32_2 = arith.constant 0 : i32
    return %c0_i32_0, %2, %c0_i32_1 : i32, i32, i32
  }
  func.func @transform_1(%arg0: i32, %arg1: i32) -> (i32, i32, i32) {
    %c1_i32 = arith.constant 1 : i32
    %0 = arith.muli %arg0, %c1_i32 : i32
    %1 = arith.addi %0, %arg1 : i32
    %c0_i32 = arith.constant 0 : i32
    %2 = arith.minsi %1, %c0_i32 : i32
    %c0_i32_0 = arith.constant 0 : i32
    %c0_i32_1 = arith.constant 0 : i32
    %c0_i32_2 = arith.constant 0 : i32
    return %c0_i32_0, %2, %c0_i32_1 : i32, i32, i32
  }
  func.func @transform_2(%arg0: i32, %arg1: i32) -> (i32, i32, i32, i32) {
    %c0_i32 = arith.constant 0 : i32
    %c0_i32_0 = arith.constant 0 : i32
    %c0_i32_1 = arith.constant 0 : i32
    %c0_i32_2 = arith.constant 0 : i32
    return %arg0, %c0_i32, %c0_i32_0, %c0_i32_1 : i32, i32, i32, i32
  }
  func.func @transform_3(%arg0: i32, %arg1: i32) -> (i32, i32, i32, i32) {
    %c0_i32 = arith.constant 0 : i32
    %c0_i32_0 = arith.constant 0 : i32
    %c0_i32_1 = arith.constant 0 : i32
    %c0_i32_2 = arith.constant 0 : i32
    return %arg0, %c0_i32, %c0_i32_0, %c0_i32_1 : i32, i32, i32, i32
  }
  func.func @transform_4(%arg0: i32, %arg1: i32) -> (i32, i32, i32, i32) {
    %c0_i32 = arith.constant 0 : i32
    %c0_i32_0 = arith.constant 0 : i32
    %c0_i32_1 = arith.constant 0 : i32
    %c0_i32_2 = arith.constant 0 : i32
    return %arg0, %c0_i32, %c0_i32_0, %c0_i32_1 : i32, i32, i32, i32
  }
}

</mosaic_0001>

<llo_original>
// kernel: tpu_custom_call.1
$region0: #{tpu_custom_call.1}
  #allocation0 [shape = 'u32[]', space=smem, size = 0x4, offset = 0x4, fixed_abs, tag = 'smem constant byte address 0x4 - core index']
  #allocation1 [shape = 'u32[72,128]{1,0:T(1,128)}', space=vmem, size = 0x9000, scoped, tag = 'internal scratch']
  %s0 = inlined_call_operand.hbm [shape: f32[2,8,128], index: 0, kind: input, shape index: {}]
  %s1 = inlined_call_operand.hbm [shape: f32[2,8,128], index: 1, kind: input, shape index: {}]
  %s2 = inlined_call_operand.hbm [shape: f32[1,2,8,128], index: 2, kind: output, shape index: {0}]
  %s3 = inlined_call_operand.hbm [shape: f32[1,2,8,128], index: 3, kind: output, shape index: {1}]
  %s4 = inlined_call_operand.hbm [shape: f32[1,2,8,128], index: 4, kind: output, shape index: {2}]
  %5 = xla_tuple %s2, %s3, %s4
  %s6 = sld [smem:[#allocation0]]
  $region46: #{tpu_custom_call.1} parent=0
    _
  %s8 = ssub.s32 1, %s6
  %s9 = scalar_select 0, %s8, %s6
  $region1: #{tpu_custom_call.1} parent=0
    #allocation2 [shape = 'u8[8192]{0}', space=vmem, size = 0x2000, scoped, tag = 'input window, operand 0, single buffered']
    #allocation3 [shape = 's32[1]{0}', space=sflag, size = 0x4, scoped, tag = 'scoped memory for tpu_custom_call.1']
    #allocation4 [shape = 's32[1]{0}', space=sflag, size = 0x4, scoped, tag = 'scoped memory for tpu_custom_call.1']
    #allocation5 [shape = 'u8[8192]{0}', space=vmem, size = 0x2000, scoped, tag = 'input window, operand 1, single buffered']
    #allocation6 [shape = 's32[1]{0}', space=sflag, size = 0x4, scoped, tag = 'scoped memory for tpu_custom_call.1']
    #allocation7 [shape = 'u8[8192]{0}', space=vmem, size = 0x2000, scoped, tag = 'output window, operand 0, single buffered']
    #allocation8 [shape = 'u8[8192]{0}', space=vmem, size = 0x2000, scoped, tag = 'output window, operand 1, single buffered']
    #allocation9 [shape = 's32[1]{0}', space=sflag, size = 0x4, scoped, tag = 'scoped memory for tpu_custom_call.1']
    #allocation10 [shape = 'u8[8192]{0}', space=vmem, size = 0x2000, scoped, tag = 'output window, operand 2, single buffered']
    %10 = vsyncpa [#allocation3], 0
    %11 = vsyncpa [#allocation6], 0
    %12 = vsyncpa [#allocation4], 0
    %13 = vsyncpa [#allocation9], 0
    // Predicated region
    $region2: #{tpu_custom_call.1} parent=1 // pred_check
      _
    $region3: #{tpu_custom_call.1} parent=1 // pred_check_branch
      %15 = sbr.rel (0) target = $region5
    $region4: #{tpu_custom_call.1} parent=1 // pred_region
      %s16 = sadd.s32 0, 0
      %p17 = scmp.lt.s32.totalorder %s16, 0
      %s18 = scalar_select %p17, %s16, 0
      %20 = vsyncadd [#allocation3], 0
      %s21 = smul.addr %s18, 8
      %s22 = scalar_lea.hbm %s0, %s21
      %s23 = sshll.u32 %s22, 4
      %s24 = int_to_ptr.hbm [resolvable:$true] %s23
      %s25 = sshll.u32 [#allocation2], 4
      %s26 = int_to_ptr.vmem [resolvable:$true] %s25
      %31 = dma.hbm_to_vmem [thread:$0]  %s24, 256, %s26, [#allocation3], 128, 128, 8
    $region5: #{tpu_custom_call.1} parent=1 // pred_fallthru
      _
    // Predicated region
    $region6: #{tpu_custom_call.1} parent=1 // pred_check
      _
    $region7: #{tpu_custom_call.1} parent=1 // pred_check_branch
      %33 = sbr.rel (0) target = $region9
    $region8: #{tpu_custom_call.1} parent=1 // pred_region
      %s34 = sadd.s32 0, 0
      %p35 = scmp.lt.s32.totalorder %s34, 0
      %s36 = scalar_select %p35, %s34, 0
      %38 = vsyncadd [#allocation6], 0
      %s39 = smul.addr %s36, 8
      %s40 = scalar_lea.hbm %s1, %s39
      %s41 = sshll.u32 %s40, 4
      %s42 = int_to_ptr.hbm [resolvable:$true] %s41
      %s43 = sshll.u32 [#allocation5], 4
      %s44 = int_to_ptr.vmem [resolvable:$true] %s43
      %49 = dma.hbm_to_vmem [thread:$0]  %s42, 256, %s44, [#allocation6], 128, 128, 8
    $region9: #{tpu_custom_call.1} parent=1 // pred_fallthru
      _
    // Predicated region
    $region10: #{tpu_custom_call.1} parent=1 // pred_check
      _
    $region11: #{tpu_custom_call.1} parent=1 // pred_check_branch
      %51 = sbr.rel (0) target = $region13
    $region12: #{tpu_custom_call.1} parent=1 // pred_region
      %53 = dma.done [#allocation3], 256
    $region13: #{tpu_custom_call.1} parent=1 // pred_fallthru
      _
    // Predicated region
    $region14: #{tpu_custom_call.1} parent=1 // pred_check
      _
    $region15: #{tpu_custom_call.1} parent=1 // pred_check_branch
      %55 = sbr.rel (0) target = $region17
    $region16: #{tpu_custom_call.1} parent=1 // pred_region
      %57 = dma.done [#allocation6], 256
    $region17: #{tpu_custom_call.1} parent=1 // pred_fallthru
      _
    %s58 = sadd.s32 0, 0
    %p59 = scmp.lt.s32.totalorder %s58, 0
    %s60 = scalar_select %p59, %s58, 0
    %s61 = sadd.s32 0, 0
    %p62 = scmp.lt.s32.totalorder %s61, 0
    %s63 = scalar_select %p62, %s61, 0
    %p64 = scmp.eq.s32.totalorder 0, 0
    // Predicated region
    $region18: #{tpu_custom_call.1} parent=1 // pred_check
      %p65 = pneg %p64
    $region19: #{tpu_custom_call.1} parent=1 // pred_check_branch
      %67 = sbr.rel (%p65) target = $region21
    $region20: #{tpu_custom_call.1} parent=1 // pred_region
      %68 = vst [vmem:[#allocation7] sm:$0xff] 0.0
      %69 = vst [vmem:[#allocation7 + $0x8] sm:$0xff] 0.0
      %70 = vst [vmem:[#allocation8] sm:$0xff] 0.0
      %71 = vst [vmem:[#allocation8 + $0x8] sm:$0xff] 0.0
      %72 = vst [vmem:[#allocation10] sm:$0xff] 0.0
      %73 = vst [vmem:[#allocation10 + $0x8] sm:$0xff] 0.0
    $region21: #{tpu_custom_call.1} parent=1 // pred_fallthru
      _
    %v74 = vld [vmem:[#allocation2] sm:$0xff]
    %v75 = vld [vmem:[#allocation2 + $0x8] sm:$0xff]
    %v76 = vld [vmem:[#allocation5] sm:$0xff]
    %v77 = vld [vmem:[#allocation5 + $0x8] sm:$0xff]
    %v78 = vmul.f32 %v74, %v76
    %v79 = vmul.f32 %v75, %v77
    %v80 = vmul.f32 %v74, %v74
    %v81 = vmul.f32 %v75, %v75
    %v82 = vmul.f32 %v76, %v76
    %v83 = vmul.f32 %v77, %v77
    %v84 = vld [vmem:[#allocation7] sm:$0xff]
    %v85 = vld [vmem:[#allocation7 + $0x8] sm:$0xff]
    %v86 = vadd.f32 %v78, 0.0
    %v87 = vadd.f32 %v79, 0.0
    %v88 = vadd.f32 %v84, %v86
    %v89 = vadd.f32 %v85, %v87
    %90 = vst [vmem:[#allocation7] sm:$0xff] %v88
    %91 = vst [vmem:[#allocation7 + $0x8] sm:$0xff] %v89
    %v92 = vld [vmem:[#allocation8] sm:$0xff]
    %v93 = vld [vmem:[#allocation8 + $0x8] sm:$0xff]
    %v94 = vadd.f32 %v80, 0.0
    %v95 = vadd.f32 %v81, 0.0
    %v96 = vadd.f32 %v92, %v94
    %v97 = vadd.f32 %v93, %v95
    %98 = vst [vmem:[#allocation8] sm:$0xff] %v96
    %99 = vst [vmem:[#allocation8 + $0x8] sm:$0xff] %v97
    %v100 = vld [vmem:[#allocation10] sm:$0xff]
    %v101 = vld [vmem:[#allocation10 + $0x8] sm:$0xff]
    %v102 = vadd.f32 %v82, 0.0
    %v103 = vadd.f32 %v83, 0.0
    %v104 = vadd.f32 %v100, %v102
    %v105 = vadd.f32 %v101, %v103
    %106 = vst [vmem:[#allocation10] sm:$0xff] %v104
    %107 = vst [vmem:[#allocation10 + $0x8] sm:$0xff] %v105
    // Predicated region
    $region22: #{tpu_custom_call.1} parent=1 // pred_check
      _
    $region23: #{tpu_custom_call.1} parent=1 // pred_check_branch
      %109 = sbr.rel (0) target = $region25
    $region24: #{tpu_custom_call.1} parent=1 // pred_region
      %111 = vsyncadd [#allocation4], 0
      %s112 = sshll.u32 [#allocation7], 4
      %s113 = int_to_ptr.vmem [resolvable:$true] %s112
      %s114 = sshll.u32 %s2, 4
      %s115 = int_to_ptr.hbm [resolvable:$true] %s114
      %120 = dma.vmem_to_hbm [thread:$0]  %s113, 256, %s115, [#allocation4], 128, 128, 8
    $region25: #{tpu_custom_call.1} parent=1 // pred_fallthru
      _
    // Predicated region
    $region26: #{tpu_custom_call.1} parent=1 // pred_check
      _
    $region27: #{tpu_custom_call.1} parent=1 // pred_check_branch
      %122 = sbr.rel (0) target = $region29
    $region28: #{tpu_custom_call.1} parent=1 // pred_region
      %124 = vsyncadd [#allocation9], 0
      %s125 = sshll.u32 [#allocation8], 4
      %s126 = int_to_ptr.vmem [resolvable:$true] %s125
      %s127 = sshll.u32 %s3, 4
      %s128 = int_to_ptr.hbm [resolvable:$true] %s127
      %133 = dma.vmem_to_hbm [thread:$0]  %s126, 256, %s128, [#allocation9], 128, 128, 8
    $region29: #{tpu_custom_call.1} parent=1 // pred_fallthru
      _
    // Predicated region
    $region30: #{tpu_custom_call.1} parent=1 // pred_check
      _
    $region31: #{tpu_custom_call.1} parent=1 // pred_check_branch
      %135 = sbr.rel (0) target = $region33
    $region32: #{tpu_custom_call.1} parent=1 // pred_region
      %137 = vsyncadd [#allocation9], 0
      %s138 = sshll.u32 [#allocation10], 4
      %s139 = int_to_ptr.vmem [resolvable:$true] %s138
      %s140 = sshll.u32 %s4, 4
      %s141 = int_to_ptr.hbm [resolvable:$true] %s140
      %146 = dma.vmem_to_hbm [thread:$0]  %s139, 256, %s141, [#allocation9], 128, 128, 8
    $region33: #{tpu_custom_call.1} parent=1 // pred_fallthru
      _
    // Predicated region
    $region34: #{tpu_custom_call.1} parent=1 // pred_check
      _
    $region35: #{tpu_custom_call.1} parent=1 // pred_check_branch
      %148 = sbr.rel (0) target = $region37
    $region36: #{tpu_custom_call.1} parent=1 // pred_region
      %150 = dma.done [#allocation4], 256
    $region37: #{tpu_custom_call.1} parent=1 // pred_fallthru
      _
    // Predicated region
    $region38: #{tpu_custom_call.1} parent=1 // pred_check
      _
    $region39: #{tpu_custom_call.1} parent=1 // pred_check_branch
      %152 = sbr.rel (0) target = $region41
    $region40: #{tpu_custom_call.1} parent=1 // pred_region
      %154 = dma.done [#allocation9], 256
    $region41: #{tpu_custom_call.1} parent=1 // pred_fallthru
      _
    // Predicated region
    $region42: #{tpu_custom_call.1} parent=1 // pred_check
      _
    $region43: #{tpu_custom_call.1} parent=1 // pred_check_branch
      %156 = sbr.rel (0) target = $region45
    $region44: #{tpu_custom_call.1} parent=1 // pred_region
      %158 = dma.done [#allocation9], 256
    $region45: #{tpu_custom_call.1} parent=1 // pred_fallthru
      _
    %159 = vsyncpa [#allocation3], 1
    %160 = vsyncpa [#allocation6], 1
    %161 = vsyncpa [#allocation4], 1
    %162 = vsyncpa [#allocation9], 1

</llo_original>
